<compile_context>
chip_gen: v5e
topology: v5e:2x2
jax: 0.10.0
libtpu: 0.0.40
codegen_flags: <defaults>
</compile_context>

<pallas_src>
import functools

import jax
import jax.numpy as jnp
from jax.experimental import pallas as pl
from jax.experimental.pallas import tpu as pltpu

IN_DIM = 8
HID_DIM = 16
OUT_DIM = 4
GROUP = 16                    # batch elements packed per 128-lane row
ROW_IN = GROUP * IN_DIM       # 128
ROW_HID = GROUP * HID_DIM     # 256
ROW_OUT = GROUP * OUT_DIM     # 64


def _policy_kernel(x_ref, w1_ref, b1_ref, w2_ref, b2_ref, w3_ref, b3_ref,
                   g_ref, o_ref, *, act_dtype):
    # x_ref: (TR, 128) -- 16 batch elements per row, lane-dense.
    # Weights are block-diagonal packs kron(I16, W.T); biases are 16x-tiled rows.
    x = x_ref[...]                                                    # (TR, 128) f32

    z1 = jnp.dot(x, w1_ref[...], preferred_element_type=jnp.float32) + b1_ref[...]
    h1 = jnp.tanh(z1.astype(act_dtype))                               # (TR, 256)

    z2 = jnp.dot(h1, w2_ref[...], preferred_element_type=jnp.float32) + b2_ref[...]
    h2 = jnp.tanh(z2.astype(act_dtype))                               # (TR, 256)

    logits = (jnp.dot(h2, w3_ref[...], preferred_element_type=jnp.float32)
              + b3_ref[...])                                          # (TR, 64)

    # Per-row max is constant within each 4-lane action group -> softmax is
    # mathematically unchanged, and the exp argument stays bounded.
    m = jnp.max(logits, axis=-1, keepdims=True)                       # (TR, 1)
    e = jnp.exp((logits - m).astype(act_dtype))                       # (TR, 64)
    # Group sums broadcast back to every lane via one tiny block-diag matmul.
    s = jnp.dot(e, g_ref[...], preferred_element_type=jnp.float32)    # (TR, 64)
    # Exact normalization (no approx reciprocal): rows sum to 1 up to rounding.
    o_ref[...] = (e.astype(jnp.float32) / s).astype(o_ref.dtype)


def policy_gradient_network(state, params, *, tile_b=32768,
                            activation_dtype=jnp.float32):
    """state: (B, 8) float32 -> (B, 4) float32 action probabilities."""
    w1, b1, w2, b2, w3, b3 = params
    assert tile_b % 128 == 0, "tile_b must be a multiple of 128"
    B = state.shape[0]

    # Pack 16 batch elements per 128-lane row.  The reshape is free (row-major
    # contiguous); only a non-multiple-of-16 batch needs a tiny edge pad.
    rem = B % GROUP
    if rem:
        state = jnp.pad(state, ((0, GROUP - rem), (0, 0)))
    R = state.shape[0] // GROUP
    x2 = state.reshape(R, ROW_IN)                                     # (R, 128)

    # Block-diagonal packed weights (built once per call; ~0.5 MiB total).
    f32 = jnp.float32
    eye = jnp.eye(GROUP, dtype=f32)
    w1p = jnp.kron(eye, w1.T.astype(f32))                             # (128, 256)
    w2p = jnp.kron(eye, w2.T.astype(f32))                             # (256, 256)
    w3p = jnp.kron(eye, w3.T.astype(f32))                             # (256, 64)
    b1p = jnp.tile(b1.astype(f32), GROUP)[None, :]                    # (1, 256)
    b2p = jnp.tile(b2.astype(f32), GROUP)[None, :]                    # (1, 256)
    b3p = jnp.tile(b3.astype(f32), GROUP)[None, :]                    # (1, 64)
    gmat = jnp.kron(eye, jnp.ones((OUT_DIM, OUT_DIM), f32))           # (64, 64)

    max_rows = tile_b // GROUP                  # multiple of 8 (tile_b % 128 == 0)
    if R <= max_rows:
        tr = R                                  # single block covers the batch
    else:
        tr = max_rows
    grid = (pl.cdiv(R, tr),)                    # ragged last block handled by Pallas

    const = lambda i: (0, 0)                    # weights/biases stay VMEM-resident
    kernel = functools.partial(_policy_kernel, act_dtype=activation_dtype)

    out = pl.pallas_call(
        kernel,
        out_shape=jax.ShapeDtypeStruct((R, ROW_OUT), jnp.float32),
        grid_spec=pltpu.PrefetchScalarGridSpec(
            num_scalar_prefetch=0,
            grid=grid,
            in_specs=[
                pl.BlockSpec((tr, ROW_IN), lambda i: (i, 0)),         # packed x
                pl.BlockSpec((ROW_IN, ROW_HID), const),               # w1 (block-diag)
                pl.BlockSpec((1, ROW_HID), const),                    # b1 (tiled)
                pl.BlockSpec((ROW_HID, ROW_HID), const),              # w2
                pl.BlockSpec((1, ROW_HID), const),                    # b2
                pl.BlockSpec((ROW_HID, ROW_OUT), const),              # w3
                pl.BlockSpec((1, ROW_OUT), const),                    # b3
                pl.BlockSpec((ROW_OUT, ROW_OUT), const),              # group-sum ones
            ],
            out_specs=pl.BlockSpec((tr, ROW_OUT), lambda i: (i, 0)),  # packed probs
        ),
        compiler_params=pltpu.CompilerParams(
            dimension_semantics=("parallel",)),                       # v7x: 2 TCs split batch
    )(x2, w1p, b1p, w2p, b2p, w3p, b3p, gmat)                         # (R, 64)

    # Free reshape back to (B, 4); the slice is a no-op when B % 16 == 0.
    return out.reshape(-1, OUT_DIM)[:B]


def init_params(key):
    """PyTorch nn.Linear default init: U(-k, k), k = 1/sqrt(fan_in).
    Weights kept in the PyTorch [out, in] layout; biases shape [out]."""
    def linear(key, fan_in, fan_out):
        kw, kb = jax.random.split(key)
        bound = float(fan_in) ** -0.5
        w = jax.random.uniform(kw, (fan_out, fan_in), jnp.float32, -bound, bound)
        b = jax.random.uniform(kb, (fan_out,), jnp.float32, -bound, bound)
        return w, b

    k1, k2, k3 = jax.random.split(key, 3)
    w1, b1 = linear(k1, IN_DIM, HID_DIM)
    w2, b2 = linear(k2, HID_DIM, HID_DIM)
    w3, b3 = linear(k3, HID_DIM, OUT_DIM)
    return w1, b1, w2, b2, w3, b3


def reference_forward(state, params):
    """Pure-JAX reference for sanity checking (intended fc1->fc2->fc3 chain)."""
    w1, b1, w2, b2, w3, b3 = params
    h1 = jnp.tanh(state @ w1.T + b1)
    h2 = jnp.tanh(h1 @ w2.T + b2)
    return jax.nn.softmax(h2 @ w3.T + b3, axis=1)


if __name__ == "__main__":
    key = jax.random.PRNGKey(0)
    k_params, k_state = jax.random.split(key)
    params = init_params(k_params)

    # Small, module-natural shape: batch=8, state_dim=8 (single packed row).
    state = jax.random.normal(k_state, (8, IN_DIM), jnp.float32)
    out = jax.block_until_ready(policy_gradient_network(state, params))
    ref = reference_forward(state, params)
    assert out.shape == (8, OUT_DIM)
    assert jnp.allclose(out, ref, atol=1e-4), "mismatch vs JAX reference (small batch)"
    assert jnp.allclose(jnp.sum(out, axis=1), jnp.ones(8), atol=1e-4)

    # Multi-block + ragged last block: B=304 -> 19 packed rows, tile of 16 rows
    # -> grid = cdiv(19, 16) = 2; exercises VMEM-resident weights + masking.
    state_big = jax.random.normal(k_state, (304, IN_DIM), jnp.float32)
    out_big = jax.block_until_ready(
        policy_gradient_network(state_big, params, tile_b=256))
    ref_big = reference_forward(state_big, params)
    assert out_big.shape == (304, OUT_DIM)
    assert jnp.allclose(out_big, ref_big, atol=1e-4), "mismatch vs JAX reference (tiled)"

    # bf16 transcendental fast path (v6e/v7x); numerics ~1e-2, still sums to 1.
    out_bf16 = jax.block_until_ready(
        policy_gradient_network(state_big, params, tile_b=256,
                                activation_dtype=jnp.bfloat16))
    assert jnp.allclose(out_bf16, ref_big, atol=3e-2), "mismatch (bf16 activations)"

    print("KERNEL_OK")
</pallas_src>

<mosaic_0001>
module attributes {stable_mosaic.version = 11 : i64} {
  func.func @_policy_kernel(%arg0: i32, %arg1: memref<1x128xf32, #tpu.memory_space<vmem>>, %arg2: memref<128x256xf32, #tpu.memory_space<vmem>>, %arg3: memref<1x256xf32, #tpu.memory_space<vmem>>, %arg4: memref<256x256xf32, #tpu.memory_space<vmem>>, %arg5: memref<1x256xf32, #tpu.memory_space<vmem>>, %arg6: memref<256x64xf32, #tpu.memory_space<vmem>>, %arg7: memref<1x64xf32, #tpu.memory_space<vmem>>, %arg8: memref<64x64xf32, #tpu.memory_space<vmem>>, %arg9: memref<1x64xf32, #tpu.memory_space<vmem>>) attributes {dimension_semantics = [#tpu.dimension_semantics<parallel>], iteration_bounds = array<i64: 1>, scalar_prefetch = 0 : i64, scratch_operands = 0 : i64, tpu.core_type = #tpu.core_type<tc>, window_params = [{transform_indices = @transform_0, window_bounds = array<i64: 1, 128>}, {pipeline_mode = #tpu.pipeline_mode<synchronous>, transform_indices = @transform_1, window_bounds = array<i64: 128, 256>}, {pipeline_mode = #tpu.pipeline_mode<synchronous>, transform_indices = @transform_2, window_bounds = array<i64: 1, 256>}, {pipeline_mode = #tpu.pipeline_mode<synchronous>, transform_indices = @transform_3, window_bounds = array<i64: 256, 256>}, {pipeline_mode = #tpu.pipeline_mode<synchronous>, transform_indices = @transform_4, window_bounds = array<i64: 1, 256>}, {pipeline_mode = #tpu.pipeline_mode<synchronous>, transform_indices = @transform_5, window_bounds = array<i64: 256, 64>}, {pipeline_mode = #tpu.pipeline_mode<synchronous>, transform_indices = @transform_6, window_bounds = array<i64: 1, 64>}, {pipeline_mode = #tpu.pipeline_mode<synchronous>, transform_indices = @transform_7, window_bounds = array<i64: 64, 64>}, {transform_indices = @transform_8, window_bounds = array<i64: 1, 64>}]} {
    %c0 = arith.constant 0 : index
    %c0_0 = arith.constant 0 : index
    %0 = vector.load %arg1[%c0, %c0_0] : memref<1x128xf32, #tpu.memory_space<vmem>>, vector<1x128xf32>
    %c0_1 = arith.constant 0 : index
    %c0_2 = arith.constant 0 : index
    %1 = vector.load %arg2[%c0_1, %c0_2] : memref<128x256xf32, #tpu.memory_space<vmem>>, vector<128x256xf32>
    %cst = arith.constant dense<0.000000e+00> : vector<1x256xf32>
    %2 = tpu.matmul %0, %1, %cst {dimension_numbers = #tpu.dot_dimension_numbers<[1], [0], [0], [1], [0, 0, 1, 1], [], []>} : vector<1x128xf32>, vector<128x256xf32>, vector<1x256xf32> -> vector<1x256xf32>
    %c0_3 = arith.constant 0 : index
    %c0_4 = arith.constant 0 : index
    %3 = vector.load %arg3[%c0_3, %c0_4] : memref<1x256xf32, #tpu.memory_space<vmem>>, vector<1x256xf32>
    %4 = arith.addf %2, %3 : vector<1x256xf32>
    %5 = math.tanh %4 : vector<1x256xf32>
    %c0_5 = arith.constant 0 : index
    %c0_6 = arith.constant 0 : index
    %6 = vector.load %arg4[%c0_5, %c0_6] : memref<256x256xf32, #tpu.memory_space<vmem>>, vector<256x256xf32>
    %cst_7 = arith.constant dense<0.000000e+00> : vector<1x256xf32>
    %7 = tpu.matmul %5, %6, %cst_7 {dimension_numbers = #tpu.dot_dimension_numbers<[1], [0], [0], [1], [0, 0, 1, 1], [], []>} : vector<1x256xf32>, vector<256x256xf32>, vector<1x256xf32> -> vector<1x256xf32>
    %c0_8 = arith.constant 0 : index
    %c0_9 = arith.constant 0 : index
    %8 = vector.load %arg5[%c0_8, %c0_9] : memref<1x256xf32, #tpu.memory_space<vmem>>, vector<1x256xf32>
    %9 = arith.addf %7, %8 : vector<1x256xf32>
    %10 = math.tanh %9 : vector<1x256xf32>
    %c0_10 = arith.constant 0 : index
    %c0_11 = arith.constant 0 : index
    %11 = vector.load %arg6[%c0_10, %c0_11] : memref<256x64xf32, #tpu.memory_space<vmem>>, vector<256x64xf32>
    %cst_12 = arith.constant dense<0.000000e+00> : vector<1x64xf32>
    %12 = tpu.matmul %10, %11, %cst_12 {dimension_numbers = #tpu.dot_dimension_numbers<[1], [0], [0], [1], [0, 0, 1, 1], [], []>} : vector<1x256xf32>, vector<256x64xf32>, vector<1x64xf32> -> vector<1x64xf32>
    %c0_13 = arith.constant 0 : index
    %c0_14 = arith.constant 0 : index
    %13 = vector.load %arg7[%c0_13, %c0_14] : memref<1x64xf32, #tpu.memory_space<vmem>>, vector<1x64xf32>
    %14 = arith.addf %12, %13 : vector<1x64xf32>
    %cst_15 = arith.constant dense<0xFF800000> : vector<1xf32>
    %15 = vector.multi_reduction <maximumf>, %14, %cst_15 [1] : vector<1x64xf32> to vector<1xf32>
    %16 = vector.shape_cast %15 : vector<1xf32> to vector<1x1xf32>
    %17 = vector.broadcast %16 : vector<1x1xf32> to vector<1x64xf32>
    %18 = arith.subf %14, %17 : vector<1x64xf32>
    %19 = math.exp %18 : vector<1x64xf32>
    %c0_16 = arith.constant 0 : index
    %c0_17 = arith.constant 0 : index
    %20 = vector.load %arg8[%c0_16, %c0_17] : memref<64x64xf32, #tpu.memory_space<vmem>>, vector<64x64xf32>
    %cst_18 = arith.constant dense<0.000000e+00> : vector<1x64xf32>
    %21 = tpu.matmul %19, %20, %cst_18 {dimension_numbers = #tpu.dot_dimension_numbers<[1], [0], [0], [1], [0, 0, 1, 1], [], []>} : vector<1x64xf32>, vector<64x64xf32>, vector<1x64xf32> -> vector<1x64xf32>
    %22 = arith.divf %19, %21 : vector<1x64xf32>
    %c0_19 = arith.constant 0 : index
    %c0_20 = arith.constant 0 : index
    %23 = vector.load %arg9[%c0_19, %c0_20] : memref<1x64xf32, #tpu.memory_space<vmem>>, vector<1x64xf32>
    tpu.vector_store %arg9[%c0_19, %c0_20], %22 {strides = array<i32>} : memref<1x64xf32, #tpu.memory_space<vmem>>, vector<1x64xf32>,
    return
  }
  func.func @transform_0(%arg0: i32) -> (i32, i32) {
    %c0_i32 = arith.constant 0 : i32
    %c0_i32_0 = arith.constant 0 : i32
    return %arg0, %c0_i32 : i32, i32
  }
  func.func @transform_1(%arg0: i32) -> (i32, i32) {
    %c0_i32 = arith.constant 0 : i32
    %c0_i32_0 = arith.constant 0 : i32
    %c0_i32_1 = arith.constant 0 : i32
    return %c0_i32, %c0_i32_0 : i32, i32
  }
  func.func @transform_2(%arg0: i32) -> (i32, i32) {
    %c0_i32 = arith.constant 0 : i32
    %c0_i32_0 = arith.constant 0 : i32
    %c0_i32_1 = arith.constant 0 : i32
    return %c0_i32, %c0_i32_0 : i32, i32
  }
  func.func @transform_3(%arg0: i32) -> (i32, i32) {
    %c0_i32 = arith.constant 0 : i32
    %c0_i32_0 = arith.constant 0 : i32
    %c0_i32_1 = arith.constant 0 : i32
    return %c0_i32, %c0_i32_0 : i32, i32
  }
  func.func @transform_4(%arg0: i32) -> (i32, i32) {
    %c0_i32 = arith.constant 0 : i32
    %c0_i32_0 = arith.constant 0 : i32
    %c0_i32_1 = arith.constant 0 : i32
    return %c0_i32, %c0_i32_0 : i32, i32
  }
  func.func @transform_5(%arg0: i32) -> (i32, i32) {
    %c0_i32 = arith.constant 0 : i32
    %c0_i32_0 = arith.constant 0 : i32
    %c0_i32_1 = arith.constant 0 : i32
    return %c0_i32, %c0_i32_0 : i32, i32
  }
  func.func @transform_6(%arg0: i32) -> (i32, i32) {
    %c0_i32 = arith.constant 0 : i32
    %c0_i32_0 = arith.constant 0 : i32
    %c0_i32_1 = arith.constant 0 : i32
    return %c0_i32, %c0_i32_0 : i32, i32
  }
  func.func @transform_7(%arg0: i32) -> (i32, i32) {
    %c0_i32 = arith.constant 0 : i32
    %c0_i32_0 = arith.constant 0 : i32
    %c0_i32_1 = arith.constant 0 : i32
    return %c0_i32, %c0_i32_0 : i32, i32
  }
  func.func @transform_8(%arg0: i32) -> (i32, i32) {
    %c0_i32 = arith.constant 0 : i32
    %c0_i32_0 = arith.constant 0 : i32
    return %arg0, %c0_i32 : i32, i32
  }
}

</mosaic_0001>

<llo_original>
// kernel: tpu_custom_call.1
$region0: #{tpu_custom_call.1}
  #allocation0 [shape = 'u32[]', space=smem, size = 0x4, offset = 0x4, fixed_abs, tag = 'smem constant byte address 0x4 - core index']
  #allocation1 [shape = 'u32[72,128]{1,0:T(1,128)}', space=vmem, size = 0x9000, scoped, tag = 'internal scratch']
  %s0 = inlined_call_operand.vmem [shape: f32[1,128], index: 0, kind: input, shape index: {}]
  %s1 = inlined_call_operand.vmem [shape: f32[128,256], index: 1, kind: input, shape index: {}]
  %s2 = inlined_call_operand.vmem [shape: f32[1,256], index: 2, kind: input, shape index: {}]
  %s3 = inlined_call_operand.hbm [shape: f32[256,256], index: 3, kind: input, shape index: {}]
  %s4 = inlined_call_operand.vmem [shape: f32[1,256], index: 4, kind: input, shape index: {}]
  %s5 = inlined_call_operand.vmem [shape: f32[256,64], index: 5, kind: input, shape index: {}]
  %s6 = inlined_call_operand.vmem [shape: f32[1,64], index: 6, kind: input, shape index: {}]
  %s7 = inlined_call_operand.vmem [shape: f32[64,64], index: 7, kind: input, shape index: {}]
  %s8 = inlined_call_operand.hbm [shape: f32[1,64], index: 8, kind: output, shape index: {}]
  %s9 = sld [smem:[#allocation0]]
  $region46: #{tpu_custom_call.1} parent=0
    _
  %s11 = ssub.s32 1, %s9
  %s12 = scalar_select 0, %s11, %s9
  $region1: #{tpu_custom_call.1} parent=0
    #allocation2 [shape = 'u8[262144]{0}', space=vmem, size = 0x40000, scoped, tag = 'input window, operand 3, single buffered']
    #allocation3 [shape = 's32[1]{0}', space=sflag, size = 0x4, scoped, tag = 'scoped memory for tpu_custom_call.1']
    #allocation4 [shape = 's32[1]{0}', space=sflag, size = 0x4, scoped, tag = 'scoped memory for tpu_custom_call.1']
    #allocation5 [shape = 'u8[512]{0}', space=vmem, size = 0x400, scoped, tag = 'output window, operand 0, single buffered']
    %13 = vsyncpa [#allocation3], 0
    %14 = vsyncpa [#allocation4], 0
    // Predicated region
    $region2: #{tpu_custom_call.1} parent=1 // pred_check
      _
    $region3: #{tpu_custom_call.1} parent=1 // pred_check_branch
      %16 = sbr.rel (0) target = $region5
    $region4: #{tpu_custom_call.1} parent=1 // pred_region
      _
    $region5: #{tpu_custom_call.1} parent=1 // pred_fallthru
      _
    // Predicated region
    $region6: #{tpu_custom_call.1} parent=1 // pred_check
      _
    $region7: #{tpu_custom_call.1} parent=1 // pred_check_branch
      %18 = sbr.rel (0) target = $region9
    $region8: #{tpu_custom_call.1} parent=1 // pred_region
      _
    $region9: #{tpu_custom_call.1} parent=1 // pred_fallthru
      _
    // Predicated region
    $region10: #{tpu_custom_call.1} parent=1 // pred_check
      _
    $region11: #{tpu_custom_call.1} parent=1 // pred_check_branch
      %20 = sbr.rel (0) target = $region13
    $region12: #{tpu_custom_call.1} parent=1 // pred_region
      _
    $region13: #{tpu_custom_call.1} parent=1 // pred_fallthru
      _
    // Predicated region
    $region14: #{tpu_custom_call.1} parent=1 // pred_check
      _
    $region15: #{tpu_custom_call.1} parent=1 // pred_check_branch
      %22 = sbr.rel (0) target = $region17
    $region16: #{tpu_custom_call.1} parent=1 // pred_region
      %24 = vsyncadd [#allocation3], 0
      %s25 = sshll.u32 %s3, 4
      %s26 = int_to_ptr.hbm [resolvable:$true] %s25
      %s27 = sshll.u32 [#allocation2], 4
      %s28 = int_to_ptr.vmem [resolvable:$true] %s27
      %33 = dma.hbm_to_vmem [thread:$0]  %s26, 8192, %s28, [#allocation3], 256, 256, 16
    $region17: #{tpu_custom_call.1} parent=1 // pred_fallthru
      _
    // Predicated region
    $region18: #{tpu_custom_call.1} parent=1 // pred_check
      _
    $region19: #{tpu_custom_call.1} parent=1 // pred_check_branch
      %35 = sbr.rel (0) target = $region21
    $region20: #{tpu_custom_call.1} parent=1 // pred_region
      _
    $region21: #{tpu_custom_call.1} parent=1 // pred_fallthru
      _
    // Predicated region
    $region22: #{tpu_custom_call.1} parent=1 // pred_check
      _
    $region23: #{tpu_custom_call.1} parent=1 // pred_check_branch
      %37 = sbr.rel (0) target = $region25
    $region24: #{tpu_custom_call.1} parent=1 // pred_region
      _
    $region25: #{tpu_custom_call.1} parent=1 // pred_fallthru
      _
    // Predicated region
    $region26: #{tpu_custom_call.1} parent=1 // pred_check
      _
    $region27: #{tpu_custom_call.1} parent=1 // pred_check_branch
      %39 = sbr.rel (0) target = $region29
    $region28: #{tpu_custom_call.1} parent=1 // pred_region
      _
    $region29: #{tpu_custom_call.1} parent=1 // pred_fallthru
      _
    // Predicated region
    $region30: #{tpu_custom_call.1} parent=1 // pred_check
      _
    $region31: #{tpu_custom_call.1} parent=1 // pred_check_branch
      %41 = sbr.rel (0) target = $region33
    $region32: #{tpu_custom_call.1} parent=1 // pred_region
      _
    $region33: #{tpu_custom_call.1} parent=1 // pred_fallthru
      _
    // Predicated region
    $region34: #{tpu_custom_call.1} parent=1 // pred_check
      _
    $region35: #{tpu_custom_call.1} parent=1 // pred_check_branch
      %43 = sbr.rel (0) target = $region37
    $region36: #{tpu_custom_call.1} parent=1 // pred_region
      %45 = dma.done [#allocation3], 8192
    $region37: #{tpu_custom_call.1} parent=1 // pred_fallthru
      _
    %v46 = vld [vmem:[%s0] sm:$0x1]
    %v47 = vld [vmem:[%s1] sm:$0xff]
    %v48 = vld [vmem:[%s1 + $0x8] sm:$0xff]
    %v49 = vld [vmem:[%s1 + $0x10] sm:$0xff]
    %v50 = vld [vmem:[%s1 + $0x18] sm:$0xff]
    %v51 = vld [vmem:[%s1 + $0x20] sm:$0xff]
    %v52 = vld [vmem:[%s1 + $0x28] sm:$0xff]
    %v53 = vld [vmem:[%s1 + $0x30] sm:$0xff]
    %v54 = vld [vmem:[%s1 + $0x38] sm:$0xff]
    %v55 = vld [vmem:[%s1 + $0x40] sm:$0xff]
    %v56 = vld [vmem:[%s1 + $0x48] sm:$0xff]
    %v57 = vld [vmem:[%s1 + $0x50] sm:$0xff]
    %v58 = vld [vmem:[%s1 + $0x58] sm:$0xff]
    %v59 = vld [vmem:[%s1 + $0x60] sm:$0xff]
    %v60 = vld [vmem:[%s1 + $0x68] sm:$0xff]
    %v61 = vld [vmem:[%s1 + $0x70] sm:$0xff]
    %v62 = vld [vmem:[%s1 + $0x78] sm:$0xff]
    %v63 = vld [vmem:[%s1 + $0x80] sm:$0xff]
    %v64 = vld [vmem:[%s1 + $0x88] sm:$0xff]
    %v65 = vld [vmem:[%s1 + $0x90] sm:$0xff]
    %v66 = vld [vmem:[%s1 + $0x98] sm:$0xff]
    %v67 = vld [vmem:[%s1 + $0xa0] sm:$0xff]
    %v68 = vld [vmem:[%s1 + $0xa8] sm:$0xff]
    %v69 = vld [vmem:[%s1 + $0xb0] sm:$0xff]
    %v70 = vld [vmem:[%s1 + $0xb8] sm:$0xff]
    %v71 = vld [vmem:[%s1 + $0xc0] sm:$0xff]
    %v72 = vld [vmem:[%s1 + $0xc8] sm:$0xff]
    %v73 = vld [vmem:[%s1 + $0xd0] sm:$0xff]
    %v74 = vld [vmem:[%s1 + $0xd8] sm:$0xff]
    %v75 = vld [vmem:[%s1 + $0xe0] sm:$0xff]
    %v76 = vld [vmem:[%s1 + $0xe8] sm:$0xff]
    %v77 = vld [vmem:[%s1 + $0xf0] sm:$0xff]
    %v78 = vld [vmem:[%s1 + $0xf8] sm:$0xff]
    %v79 = vld [vmem:[%s2] sm:$0x3]
    %v81 = vperm.slane %v79, 0
    %v82 = vperm.slane %v79, 1
    %85 = vmatpush.msra.mxu0 %v77
    %86 = vmatpush.msra.mxu0 %v75
    %87 = vmatpush.msra.mxu0 %v73
    %88 = vmatpush.msra.mxu0 %v71
    %89 = vmatpush.msra.mxu0 %v69
    %90 = vmatpush.msra.mxu0 %v67
    %91 = vmatpush.msra.mxu0 %v65
    %92 = vmatpush.msra.mxu0 %v63
    %93 = vmatpush.msra.mxu0 %v61
    %94 = vmatpush.msra.mxu0 %v59
    %95 = vmatpush.msra.mxu0 %v57
    %96 = vmatpush.msra.mxu0 %v55
    %97 = vmatpush.msra.mxu0 %v53
    %98 = vmatpush.msra.mxu0 %v51
    %99 = vmatpush.msra.mxu0 %v49
    %100 = vmatpush.msra.mxu0 %v47
    %101 = vmatmul.f32.gmra.mxu0 %v46
    %v102 = vpop.f32.mrf.mxu0
    %v103 = vadd.f32 %v81, %v102
    %104 = vdwg.mxu0
    %105 = vmatpush.msra.mxu0 %v78
    %106 = vmatpush.msra.mxu0 %v76
    %107 = vmatpush.msra.mxu0 %v74
    %108 = vmatpush.msra.mxu0 %v72
    %109 = vmatpush.msra.mxu0 %v70
    %110 = vmatpush.msra.mxu0 %v68
    %111 = vmatpush.msra.mxu0 %v66
    %112 = vmatpush.msra.mxu0 %v64
    %113 = vmatpush.msra.mxu0 %v62
    %114 = vmatpush.msra.mxu0 %v60
    %115 = vmatpush.msra.mxu0 %v58
    %116 = vmatpush.msra.mxu0 %v56
    %117 = vmatpush.msra.mxu0 %v54
    %118 = vmatpush.msra.mxu0 %v52
    %119 = vmatpush.msra.mxu0 %v50
    %120 = vmatpush.msra.mxu0 %v48
    %121 = vmatmul.f32.gmra.mxu0 %v46
    %v122 = vpop.f32.mrf.mxu0
    %v123 = vadd.f32 %v82, %v122
    %124 = vdwg.mxu0
    %v125 = vtanh.pop %v103
    %v126 = vtanh.pop %v123
    %v127 = vld [vmem:[#allocation2] sm:$0xff]
    %v128 = vld [vmem:[#allocation2 + $0x8] sm:$0xff]
    %v129 = vld [vmem:[#allocation2 + $0x10] sm:$0xff]
    %v130 = vld [vmem:[#allocation2 + $0x18] sm:$0xff]
    %v131 = vld [vmem:[#allocation2 + $0x20] sm:$0xff]
    %v132 = vld [vmem:[#allocation2 + $0x28] sm:$0xff]
    %v133 = vld [vmem:[#allocation2 + $0x30] sm:$0xff]
    %v134 = vld [vmem:[#allocation2 + $0x38] sm:$0xff]
    %v135 = vld [vmem:[#allocation2 + $0x40] sm:$0xff]
    %v136 = vld [vmem:[#allocation2 + $0x48] sm:$0xff]
    %v137 = vld [vmem:[#allocation2 + $0x50] sm:$0xff]
    %v138 = vld [vmem:[#allocation2 + $0x58] sm:$0xff]
    %v139 = vld [vmem:[#allocation2 + $0x60] sm:$0xff]
    %v140 = vld [vmem:[#allocation2 + $0x68] sm:$0xff]
    %v141 = vld [vmem:[#allocation2 + $0x70] sm:$0xff]
    %v142 = vld [vmem:[#allocation2 + $0x78] sm:$0xff]
    %v143 = vld [vmem:[#allocation2 + $0x80] sm:$0xff]
    %v144 = vld [vmem:[#allocation2 + $0x88] sm:$0xff]
    %v145 = vld [vmem:[#allocation2 + $0x90] sm:$0xff]
    %v146 = vld [vmem:[#allocation2 + $0x98] sm:$0xff]
    %v147 = vld [vmem:[#allocation2 + $0xa0] sm:$0xff]
    %v148 = vld [vmem:[#allocation2 + $0xa8] sm:$0xff]
    %v149 = vld [vmem:[#allocation2 + $0xb0] sm:$0xff]
    %v150 = vld [vmem:[#allocation2 + $0xb8] sm:$0xff]
    %v151 = vld [vmem:[#allocation2 + $0xc0] sm:$0xff]
    %v152 = vld [vmem:[#allocation2 + $0xc8] sm:$0xff]
    %v153 = vld [vmem:[#allocation2 + $0xd0] sm:$0xff]
    %v154 = vld [vmem:[#allocation2 + $0xd8] sm:$0xff]
    %v155 = vld [vmem:[#allocation2 + $0xe0] sm:$0xff]
    %v156 = vld [vmem:[#allocation2 + $0xe8] sm:$0xff]
    %v157 = vld [vmem:[#allocation2 + $0xf0] sm:$0xff]
    %v158 = vld [vmem:[#allocation2 + $0xf8] sm:$0xff]
    %v159 = vld [vmem:[#allocation2 + $0x100] sm:$0xff]
    %v160 = vld [vmem:[#allocation2 + $0x108] sm:$0xff]
    %v161 = vld [vmem:[#allocation2 + $0x110] sm:$0xff]
    %v162 = vld [vmem:[#allocation2 + $0x118] sm:$0xff]
    %v163 = vld [vmem:[#allocation2 + $0x120] sm:$0xff]
    %v164 = vld [vmem:[#allocation2 + $0x128] sm:$0xff]
    %v165 = vld [vmem:[#allocation2 + $0x130] sm:$0xff]
    %v166 = vld [vmem:[#allocation2 + $0x138] sm:$0xff]
    %v167 = vld [vmem:[#allocation2 + $0x140] sm:$0xff]
    %v168 = vld [vmem:[#allocation2 + $0x148] sm:$0xff]
    %v169 = vld [vmem:[#allocation2 + $0x150] sm:$0xff]
    %v170 = vld [vmem:[#allocation2 + $0x158] sm:$0xff]
    %v171 = vld [vmem:[#allocation2 + $0x160] sm:$0xff]
    %v172 = vld [vmem:[#allocation2 + $0x168] sm:$0xff]
    %v173 = vld [vmem:[#allocation2 + $0x170] sm:$0xff]
    %v174 = vld [vmem:[#allocation2 + $0x178] sm:$0xff]
    %v175 = vld [vmem:[#allocation2 + $0x180] sm:$0xff]
    %v176 = vld [vmem:[#allocation2 + $0x188] sm:$0xff]
    %v177 = vld [vmem:[#allocation2 + $0x190] sm:$0xff]
    %v178 = vld [vmem:[#allocation2 + $0x198] sm:$0xff]
    %v179 = vld [vmem:[#allocation2 + $0x1a0] sm:$0xff]
    %v180 = vld [vmem:[#allocation2 + $0x1a8] sm:$0xff]
    %v181 = vld [vmem:[#allocation2 + $0x1b0] sm:$0xff]
    %v182 = vld [vmem:[#allocation2 + $0x1b8] sm:$0xff]
    %v183 = vld [vmem:[#allocation2 + $0x1c0] sm:$0xff]
    %v184 = vld [vmem:[#allocation2 + $0x1c8] sm:$0xff]
    %v185 = vld [vmem:[#allocation2 + $0x1d0] sm:$0xff]
    %v186 = vld [vmem:[#allocation2 + $0x1d8] sm:$0xff]
    %v187 = vld [vmem:[#allocation2 + $0x1e0] sm:$0xff]
    %v188 = vld [vmem:[#allocation2 + $0x1e8] sm:$0xff]
    %v189 = vld [vmem:[#allocation2 + $0x1f0] sm:$0xff]
    %v190 = vld [vmem:[#allocation2 + $0x1f8] sm:$0xff]
    %v191 = vld [vmem:[%s4] sm:$0x3]
    %v193 = vperm.slane %v191, 0
    %v194 = vperm.slane %v191, 1
    %197 = vmatpush.msra.mxu0 %v157
    %198 = vmatpush.msra.mxu0 %v155
    %199 = vmatpush.msra.mxu0 %v153
    %200 = vmatpush.msra.mxu0 %v151
    %201 = vmatpush.msra.mxu0 %v149
    %202 = vmatpush.msra.mxu0 %v147
    %203 = vmatpush.msra.mxu0 %v145
    %204 = vmatpush.msra.mxu0 %v143
    %205 = vmatpush.msra.mxu0 %v141
    %206 = vmatpush.msra.mxu0 %v139
    %207 = vmatpush.msra.mxu0 %v137
    %208 = vmatpush.msra.mxu0 %v135
    %209 = vmatpush.msra.mxu0 %v133
    %210 = vmatpush.msra.mxu0 %v131
    %211 = vmatpush.msra.mxu0 %v129
    %212 = vmatpush.msra.mxu0 %v127
    %213 = vmatmul.f32.gmra.mxu0 %v125
    %v214 = vpop.f32.mrf.mxu0
    %v215 = vadd.f32 %v193, %v214
    %216 = vdwg.mxu0
    %217 = vmatpush.msra.mxu0 %v189
    %218 = vmatpush.msra.mxu0 %v187
    %219 = vmatpush.msra.mxu0 %v185
    %220 = vmatpush.msra.mxu0 %v183
    %221 = vmatpush.msra.mxu0 %v181
    %222 = vmatpush.msra.mxu0 %v179
    %223 = vmatpush.msra.mxu0 %v177
    %224 = vmatpush.msra.mxu0 %v175
    %225 = vmatpush.msra.mxu0 %v173
    %226 = vmatpush.msra.mxu0 %v171
    %227 = vmatpush.msra.mxu0 %v169
    %228 = vmatpush.msra.mxu0 %v167
    %229 = vmatpush.msra.mxu0 %v165
    %230 = vmatpush.msra.mxu0 %v163
    %231 = vmatpush.msra.mxu0 %v161
    %232 = vmatpush.msra.mxu0 %v159
    %233 = vmatmul.f32.gmra.mxu0 %v126
    %v234 = vpop.f32.mrf.mxu0
    %v235 = vadd.f32 %v215, %v234
    %236 = vdwg.mxu0
    %237 = vmatpush.msra.mxu0 %v158
    %238 = vmatpush.msra.mxu0 %v156
    %239 = vmatpush.msra.mxu0 %v154
    %240 = vmatpush.msra.mxu0 %v152
    %241 = vmatpush.msra.mxu0 %v150
    %242 = vmatpush.msra.mxu0 %v148
    %243 = vmatpush.msra.mxu0 %v146
    %244 = vmatpush.msra.mxu0 %v144
    %245 = vmatpush.msra.mxu0 %v142
    %246 = vmatpush.msra.mxu0 %v140
    %247 = vmatpush.msra.mxu0 %v138
    %248 = vmatpush.msra.mxu0 %v136
    %249 = vmatpush.msra.mxu0 %v134
    %250 = vmatpush.msra.mxu0 %v132
    %251 = vmatpush.msra.mxu0 %v130
    %252 = vmatpush.msra.mxu0 %v128
    %253 = vmatmul.f32.gmra.mxu0 %v125
    %v254 = vpop.f32.mrf.mxu0
    %v255 = vadd.f32 %v194, %v254
    %256 = vdwg.mxu0
    %257 = vmatpush.msra.mxu0 %v190
    %258 = vmatpush.msra.mxu0 %v188
    %259 = vmatpush.msra.mxu0 %v186
    %260 = vmatpush.msra.mxu0 %v184
    %261 = vmatpush.msra.mxu0 %v182
    %262 = vmatpush.msra.mxu0 %v180
    %263 = vmatpush.msra.mxu0 %v178
    %264 = vmatpush.msra.mxu0 %v176
    %265 = vmatpush.msra.mxu0 %v174
    %266 = vmatpush.msra.mxu0 %v172
    %267 = vmatpush.msra.mxu0 %v170
    %268 = vmatpush.msra.mxu0 %v168
    %269 = vmatpush.msra.mxu0 %v166
    %270 = vmatpush.msra.mxu0 %v164
    %271 = vmatpush.msra.mxu0 %v162
    %272 = vmatpush.msra.mxu0 %v160
    %273 = vmatmul.f32.gmra.mxu0 %v126
    %v274 = vpop.f32.mrf.mxu0
    %v275 = vadd.f32 %v255, %v274
    %276 = vdwg.mxu0
    %v277 = vtanh.pop %v235
    %v278 = vtanh.pop %v275
    %v279 = vld [vmem:[%s5] sm:$0xff]
    %v280 = vld [vmem:[%s5 + $0x8] sm:$0xff]
    %v281 = vld [vmem:[%s5 + $0x10] sm:$0xff]
    %v282 = vld [vmem:[%s5 + $0x18] sm:$0xff]
    %v283 = vld [vmem:[%s5 + $0x20] sm:$0xff]
    %v284 = vld [vmem:[%s5 + $0x28] sm:$0xff]
    %v285 = vld [vmem:[%s5 + $0x30] sm:$0xff]
    %v286 = vld [vmem:[%s5 + $0x38] sm:$0xff]
    %v287 = vld [vmem:[%s5 + $0x40] sm:$0xff]
    %v288 = vld [vmem:[%s5 + $0x48] sm:$0xff]
    %v289 = vld [vmem:[%s5 + $0x50] sm:$0xff]
    %v290 = vld [vmem:[%s5 + $0x58] sm:$0xff]
    %v291 = vld [vmem:[%s5 + $0x60] sm:$0xff]
    %v292 = vld [vmem:[%s5 + $0x68] sm:$0xff]
    %v293 = vld [vmem:[%s5 + $0x70] sm:$0xff]
    %v294 = vld [vmem:[%s5 + $0x78] sm:$0xff]
    %v295 = vld [vmem:[%s5 + $0x80] sm:$0xff]
    %v296 = vld [vmem:[%s5 + $0x88] sm:$0xff]
    %v297 = vld [vmem:[%s5 + $0x90] sm:$0xff]
    %v298 = vld [vmem:[%s5 + $0x98] sm:$0xff]
    %v299 = vld [vmem:[%s5 + $0xa0] sm:$0xff]
    %v300 = vld [vmem:[%s5 + $0xa8] sm:$0xff]
    %v301 = vld [vmem:[%s5 + $0xb0] sm:$0xff]
    %v302 = vld [vmem:[%s5 + $0xb8] sm:$0xff]
    %v303 = vld [vmem:[%s5 + $0xc0] sm:$0xff]
    %v304 = vld [vmem:[%s5 + $0xc8] sm:$0xff]
    %v305 = vld [vmem:[%s5 + $0xd0] sm:$0xff]
    %v306 = vld [vmem:[%s5 + $0xd8] sm:$0xff]
    %v307 = vld [vmem:[%s5 + $0xe0] sm:$0xff]
    %v308 = vld [vmem:[%s5 + $0xe8] sm:$0xff]
    %v309 = vld [vmem:[%s5 + $0xf0] sm:$0xff]
    %v310 = vld [vmem:[%s5 + $0xf8] sm:$0xff]
    %v311 = vld [vmem:[%s6] sm:$0x1]
    %312 = vmatpush.msra.mxu0 %v294
    %313 = vmatpush.msra.mxu0 %v293
    %314 = vmatpush.msra.mxu0 %v292
    %315 = vmatpush.msra.mxu0 %v291
    %316 = vmatpush.msra.mxu0 %v290
    %317 = vmatpush.msra.mxu0 %v289
    %318 = vmatpush.msra.mxu0 %v288
    %319 = vmatpush.msra.mxu0 %v287
    %320 = vmatpush.msra.mxu0 %v286
    %321 = vmatpush.msra.mxu0 %v285
    %322 = vmatpush.msra.mxu0 %v284
    %323 = vmatpush.msra.mxu0 %v283
    %324 = vmatpush.msra.mxu0 %v282
    %325 = vmatpush.msra.mxu0 %v281
    %326 = vmatpush.msra.mxu0 %v280
    %327 = vmatpush.msra.mxu0 %v279
    %328 = vmatmul.f32.gmra.mxu0 %v277
    %v329 = vpop.f32.mrf.mxu0
    %v330 = vadd.f32 %v311, %v329
    %331 = vdwg.mxu0
    %332 = vmatpush.msra.mxu0 %v310
    %333 = vmatpush.msra.mxu0 %v309
    %334 = vmatpush.msra.mxu0 %v308
    %335 = vmatpush.msra.mxu0 %v307
    %336 = vmatpush.msra.mxu0 %v306
    %337 = vmatpush.msra.mxu0 %v305
    %338 = vmatpush.msra.mxu0 %v304
    %339 = vmatpush.msra.mxu0 %v303
    %340 = vmatpush.msra.mxu0 %v302
    %341 = vmatpush.msra.mxu0 %v301
    %342 = vmatpush.msra.mxu0 %v300
    %343 = vmatpush.msra.mxu0 %v299
    %344 = vmatpush.msra.mxu0 %v298
    %345 = vmatpush.msra.mxu0 %v297
    %346 = vmatpush.msra.mxu0 %v296
    %347 = vmatpush.msra.mxu0 %v295
    %348 = vmatmul.f32.gmra.mxu0 %v278
    %v349 = vpop.f32.mrf.mxu0
    %v350 = vadd.f32 %v330, %v349
    %351 = vdwg.mxu0
    %vm352 = vcmask 516096
    %v353 = vsel %vm352, %v350, -inf
    %354 = vmax.xlane.f32.xlu0 %v353
    %v355 = vpop.xlane.xlu0 %354
    %v356 = vsub.f32 %v350, %v355
    %v357 = vmul.f32 %v356, 1.442695
    %v358 = vpow.pop %v357
    %v359 = vld [vmem:[%s7] sm:$0xff]
    %v360 = vld [vmem:[%s7 + $0x8] sm:$0xff]
    %v361 = vld [vmem:[%s7 + $0x10] sm:$0xff]
    %v362 = vld [vmem:[%s7 + $0x18] sm:$0xff]
    %v363 = vld [vmem:[%s7 + $0x20] sm:$0xff]
    %v364 = vld [vmem:[%s7 + $0x28] sm:$0xff]
    %v365 = vld [vmem:[%s7 + $0x30] sm:$0xff]
    %v366 = vld [vmem:[%s7 + $0x38] sm:$0xff]
    %vm367 = vcmask 523264
    %v369 = vsel %vm367, %v358, 0
    %371 = vmatpush.msra.mxu0 0.0
    %372 = vmatpush.msra.mxu0 0.0
    %373 = vmatpush.msra.mxu0 0.0
    %374 = vmatpush.msra.mxu0 0.0
    %375 = vmatpush.msra.mxu0 0.0
    %376 = vmatpush.msra.mxu0 0.0
    %377 = vmatpush.msra.mxu0 0.0
    %378 = vmatpush.msra.mxu0 0.0
    %379 = vmatpush.msra.mxu0 %v366
    %380 = vmatpush.msra.mxu0 %v365
    %381 = vmatpush.msra.mxu0 %v364
    %382 = vmatpush.msra.mxu0 %v363
    %383 = vmatpush.msra.mxu0 %v362
    %384 = vmatpush.msra.mxu0 %v361
    %385 = vmatpush.msra.mxu0 %v360
    %386 = vmatpush.msra.mxu0 %v359
    %387 = vmatmul.f32.gmra.mxu0 %v369
    %v388 = vpop.f32.mrf.mxu0
    %v389 = vadd.f32 0.0, %v388
    %390 = vdwg.mxu0
    %v391 = vrcp.pop %v389
    %v392 = vmul.f32 %v389, %v391
    %v393 = vsub.f32 1.0, %v392
    %v394 = vmul.f32 %v391, %v393
    %v395 = vadd.f32 %v391, %v394
    %vm396 = vweird.f32 %v389
    %vm397 = vweird.f32 %v391
    %vm398 = vmor %vm396, %vm397
    %v399 = vsel %vm398, %v391, %v395
    %v400 = vand.u32 2147483647, %v389
    %vm401 = vcmp.eq.f32.partialorder %v400, 8.507059e+37
    %v402 = vand.u32 %v389, 2147483648
    %v403 = vor.u32 1.1754944e-38, %v402
    %v404 = vsel %vm401, %v403, %v399
    %v405 = vmul.f32 %v358, %v404
    %406 = vst.msk [vmem:[#allocation5] sm:$0x1] %vm352, %v405
    // Predicated region
    $region38: #{tpu_custom_call.1} parent=1 // pred_check
      _
    $region39: #{tpu_custom_call.1} parent=1 // pred_check_branch
      %408 = sbr.rel (0) target = $region41
    $region40: #{tpu_custom_call.1} parent=1 // pred_region
      %410 = vsyncadd [#allocation4], 0
      %s412 = sshll.u32 [#allocation5], 4
      %s413 = int_to_ptr.vmem [resolvable:$true] %s412
      %s414 = sshll.u32 %s8, 4
      %s415 = int_to_ptr.hbm [resolvable:$true] %s414
      %417 = dma.vmem_to_hbm [thread:$0]  %s413, 16, %s415, [#allocation4]
    $region41: #{tpu_custom_call.1} parent=1 // pred_fallthru
      _
    // Predicated region
    $region42: #{tpu_custom_call.1} parent=1 // pred_check
      _
    $region43: #{tpu_custom_call.1} parent=1 // pred_check_branch
      %419 = sbr.rel (0) target = $region45
    $region44: #{tpu_custom_call.1} parent=1 // pred_region
      %421 = dma.done [#allocation4], 16
    $region45: #{tpu_custom_call.1} parent=1 // pred_fallthru
      _
    %422 = vsyncpa [#allocation3], 1
    %423 = vsyncpa [#allocation4], 1

</llo_original>
